<compile_context>
chip_gen: v7x
topology: tpu7x:2x2x1
jax: 0.10.0
libtpu: 0.0.40
codegen_flags: <defaults>
</compile_context>

<pallas_src>
import jax
import jax.numpy as jnp
from jax.experimental import pallas as pl
from jax.experimental.pallas import tpu as pltpu

ACTION_DIM = 3
HIDDEN_DIM = 256        # memory_model_hidden_dim
OUT_LANES = 8           # pad A=3 up to 8 lanes (not 128) -> no zero writeback
SUBLANES = 8
TB_MAX = 2048           # max batch-tile rows (2 MiB f32 x-tile, fits all chips)
TB_SPLIT_TARGET = 1024  # don't shrink tiles below this when splitting for TCs


def _round_up(n, m):
    return (n + m - 1) // m * m


def controller_kernel(x_ref, w_ref, b_ref, o_ref):
    # x_ref: [TB, H], w_ref: [H, 8], b_ref: [1, 8], o_ref: [TB, 8]
    acc = jnp.dot(x_ref[...], w_ref[...], preferred_element_type=jnp.float32)
    o_ref[...] = jnp.tanh(acc + b_ref[...]).astype(o_ref.dtype)


def prepare_controller_params(weight, bias, compute_dtype=None):
    """One-time parameter prep, hoisted out of the per-call path.

    weight: [A, H] (PyTorch nn.Linear layout), bias: [A]
    Returns weight transposed + padded to [H, 8] (optionally cast to
    compute_dtype, e.g. jnp.bfloat16 for halved HBM streaming) and bias padded
    to [1, 8] (always f32 — epilogue stays in f32).
    """
    A, H = weight.shape
    w = weight.astype(compute_dtype) if compute_dtype is not None else weight
    w_pad = jnp.zeros((H, OUT_LANES), w.dtype).at[:, :A].set(w.T)
    b_pad = jnp.zeros((1, OUT_LANES), jnp.float32).at[0, :A].set(
        bias.astype(jnp.float32))
    return w_pad, b_pad


def _choose_tiling(B, tb_max):
    """Pick (TB, B_pad, n_tiles): bounded padding waste, warm pipeline."""
    B8 = _round_up(max(B, 1), SUBLANES)
    tb_max = max(SUBLANES, _round_up(tb_max, SUBLANES))
    # Enough tiles that no tile exceeds tb_max ...
    n_tiles = pl.cdiv(B8, tb_max)
    # ... and at least 2-4 tiles once the batch is big enough (v7x has 2 TCs
    # sharding the "parallel" batch axis), without tiles below ~1024 rows.
    n_tiles = max(n_tiles, min(4, B8 // TB_SPLIT_TARGET), 1)
    TB = _round_up(pl.cdiv(B8, n_tiles), SUBLANES)
    B_pad = n_tiles * TB          # waste < 8 rows per tile
    return TB, B_pad, n_tiles


def controller_forward_prepared(x, w_pad, b_pad, action_dim=ACTION_DIM, *,
                                tb_max=TB_MAX, small_batch_fastpath=False):
    """x: [B, H]; w_pad: [H, 8]; b_pad: [1, 8]  ->  [B, action_dim] f32."""
    B, H = x.shape
    x = x.astype(w_pad.dtype)     # bf16 streaming iff params were prepared bf16

    if small_batch_fastpath and B <= 1024:
        # For tiny batches the pallas_call launch + pipeline prologue dominate;
        # let XLA fuse the 3-wide GEMV into x's producer instead.
        acc = jnp.dot(x, w_pad[:, :action_dim],
                      preferred_element_type=jnp.float32)
        return jnp.tanh(acc + b_pad[0, :action_dim])

    TB, B_pad, n_tiles = _choose_tiling(B, tb_max)
    if B_pad != B:
        x = jnp.pad(x, ((0, B_pad - B), (0, 0)))   # padded rows -> tanh(bias), sliced off

    out = pl.pallas_call(
        controller_kernel,
        out_shape=jax.ShapeDtypeStruct((B_pad, OUT_LANES), jnp.float32),
        grid_spec=pltpu.PrefetchScalarGridSpec(
            num_scalar_prefetch=0,
            grid=(n_tiles,),
            in_specs=[
                pl.BlockSpec((TB, H), lambda i: (i, 0)),          # x: streamed
                pl.BlockSpec((H, OUT_LANES), lambda i: (0, 0)),   # weight: resident
                pl.BlockSpec((1, OUT_LANES), lambda i: (0, 0)),   # bias: resident
            ],
            out_specs=pl.BlockSpec((TB, OUT_LANES), lambda i: (i, 0)),
        ),
        compiler_params=pltpu.CompilerParams(
            dimension_semantics=("parallel",)),   # shard batch across TCs (v7x)
    )(x, w_pad, b_pad)

    # Cheap: re-reads only a [B_pad, 8] slab (32 B/row), not [B_pad, 128].
    return out[:B, :action_dim]


def controller_forward(x, weight, bias):
    """Convenience one-shot wrapper.  weight: [A, H] (PyTorch layout), bias: [A]."""
    w_pad, b_pad = prepare_controller_params(weight, bias)
    return controller_forward_prepared(x, w_pad, b_pad, weight.shape[0])


if __name__ == "__main__":
    key = jax.random.PRNGKey(0)
    kx, kw, kb, kx2 = jax.random.split(key, 4)

    # Deterministic synthetic parameters (PyTorch Linear shapes: [A, H], [A]).
    weight = jax.random.normal(kw, (ACTION_DIM, HIDDEN_DIM), jnp.float32) * 0.05
    bias = jax.random.normal(kb, (ACTION_DIM,), jnp.float32) * 0.05

    # Hoist param prep out of the call path; jit the forward itself.
    w_pad, b_pad = prepare_controller_params(weight, bias)
    fwd = jax.jit(controller_forward_prepared,
                  static_argnames=("action_dim", "tb_max", "small_batch_fastpath"))

    # 1) Small batch, single-tile grid (the common Controller call: B=8).
    batch = 8
    x = jax.random.normal(kx, (batch, HIDDEN_DIM), jnp.float32)
    out = jax.block_until_ready(fwd(x, w_pad, b_pad))
    ref = jnp.tanh(x @ weight.T + bias)
    assert out.shape == (batch, ACTION_DIM)
    assert jnp.allclose(out, ref, atol=1e-5, rtol=1e-5)

    # 2) Non-multiple-of-8 batch with a tiny tile cap -> exercises the
    #    multi-step grid pipeline and the bounded-padding path.
    batch2 = 21
    x2 = jax.random.normal(kx2, (batch2, HIDDEN_DIM), jnp.float32)
    out2 = jax.block_until_ready(fwd(x2, w_pad, b_pad, tb_max=8))
    ref2 = jnp.tanh(x2 @ weight.T + bias)
    assert out2.shape == (batch2, ACTION_DIM)
    assert jnp.allclose(out2, ref2, atol=1e-5, rtol=1e-5)

    print("KERNEL_OK")
</pallas_src>

<mosaic_0001>
module attributes {stable_mosaic.version = 11 : i64} {
  func.func @controller_kernel(%arg0: i32, %arg1: memref<8x256xf32, #tpu.memory_space<vmem>>, %arg2: memref<256x8xf32, #tpu.memory_space<vmem>>, %arg3: memref<1x8xf32, #tpu.memory_space<vmem>>, %arg4: memref<8x8xf32, #tpu.memory_space<vmem>>) attributes {dimension_semantics = [#tpu.dimension_semantics<parallel>], iteration_bounds = array<i64: 1>, scalar_prefetch = 0 : i64, scratch_operands = 0 : i64, tpu.core_type = #tpu.core_type<tc>, window_params = [{transform_indices = @transform_0, window_bounds = array<i64: 8, 256>}, {pipeline_mode = #tpu.pipeline_mode<synchronous>, transform_indices = @transform_1, window_bounds = array<i64: 256, 8>}, {pipeline_mode = #tpu.pipeline_mode<synchronous>, transform_indices = @transform_2, window_bounds = array<i64: 1, 8>}, {transform_indices = @transform_3, window_bounds = array<i64: 8, 8>}]} {
    %c0 = arith.constant 0 : index
    %c0_0 = arith.constant 0 : index
    %0 = vector.load %arg1[%c0, %c0_0] : memref<8x256xf32, #tpu.memory_space<vmem>>, vector<8x256xf32>
    %c0_1 = arith.constant 0 : index
    %c0_2 = arith.constant 0 : index
    %1 = vector.load %arg2[%c0_1, %c0_2] : memref<256x8xf32, #tpu.memory_space<vmem>>, vector<256x8xf32>
    %cst = arith.constant dense<0.000000e+00> : vector<8x8xf32>
    %2 = tpu.matmul %0, %1, %cst {dimension_numbers = #tpu.dot_dimension_numbers<[1], [0], [0], [1], [0, 0, 1, 1], [], []>} : vector<8x256xf32>, vector<256x8xf32>, vector<8x8xf32> -> vector<8x8xf32>
    %c0_3 = arith.constant 0 : index
    %c0_4 = arith.constant 0 : index
    %3 = vector.load %arg3[%c0_3, %c0_4] : memref<1x8xf32, #tpu.memory_space<vmem>>, vector<1x8xf32>
    %4 = vector.broadcast %3 : vector<1x8xf32> to vector<8x8xf32>
    %5 = arith.addf %2, %4 : vector<8x8xf32>
    %6 = math.tanh %5 : vector<8x8xf32>
    %c0_5 = arith.constant 0 : index
    %c0_6 = arith.constant 0 : index
    %7 = vector.load %arg4[%c0_5, %c0_6] : memref<8x8xf32, #tpu.memory_space<vmem>>, vector<8x8xf32>
    tpu.vector_store %arg4[%c0_5, %c0_6], %6 {strides = array<i32>} : memref<8x8xf32, #tpu.memory_space<vmem>>, vector<8x8xf32>,
    return
  }
  func.func @transform_0(%arg0: i32) -> (i32, i32) {
    %c0_i32 = arith.constant 0 : i32
    %c0_i32_0 = arith.constant 0 : i32
    return %arg0, %c0_i32 : i32, i32
  }
  func.func @transform_1(%arg0: i32) -> (i32, i32) {
    %c0_i32 = arith.constant 0 : i32
    %c0_i32_0 = arith.constant 0 : i32
    %c0_i32_1 = arith.constant 0 : i32
    return %c0_i32, %c0_i32_0 : i32, i32
  }
  func.func @transform_2(%arg0: i32) -> (i32, i32) {
    %c0_i32 = arith.constant 0 : i32
    %c0_i32_0 = arith.constant 0 : i32
    %c0_i32_1 = arith.constant 0 : i32
    return %c0_i32, %c0_i32_0 : i32, i32
  }
  func.func @transform_3(%arg0: i32) -> (i32, i32) {
    %c0_i32 = arith.constant 0 : i32
    %c0_i32_0 = arith.constant 0 : i32
    return %arg0, %c0_i32 : i32, i32
  }
}

</mosaic_0001>

<llo_original>
// kernel: controller_forward_prepared.1
$region0: #{controller_forward_prepared.1}
  #allocation0 [shape = 'u32[]', space=smem, size = 0x4, offset = 0x4, fixed_abs, tag = 'smem constant byte address 0x4 - core index']
  #allocation1 [shape = 'u32[144,128]{1,0:T(1,128)}', space=vmem, size = 0x12000, scoped, tag = 'internal scratch']
  %s0 = inlined_call_operand.vmem [shape: f32[8,256], index: 0, kind: input, shape index: {}]
  %s1 = inlined_call_operand.vmem [shape: f32[256,8], index: 1, kind: input, shape index: {}]
  %s2 = inlined_call_operand.vmem [shape: f32[1,8], index: 2, kind: input, shape index: {}]
  %s3 = inlined_call_operand.vmem [shape: f32[8,8], index: 3, kind: output, shape index: {}]
  %s4 = sld [smem:[#allocation0]]
  $region22: #{controller_forward_prepared.1} parent=0
    _
  %s6 = ssub.s32 1, %s4
  %s7 = scalar_select 0, %s6, %s4
  // Predicated region
  $region2: #{controller_forward_prepared.1} parent=0 // pred_check
    _
  $region3: #{controller_forward_prepared.1} parent=0 // pred_check_branch
    %9 = sbr.rel (0) target = $region5
  $region4: #{controller_forward_prepared.1} parent=0 // pred_region
    _
  $region5: #{controller_forward_prepared.1} parent=0 // pred_fallthru
    _
  // Predicated region
  $region6: #{controller_forward_prepared.1} parent=0 // pred_check
    _
  $region7: #{controller_forward_prepared.1} parent=0 // pred_check_branch
    %11 = sbr.rel (0) target = $region9
  $region8: #{controller_forward_prepared.1} parent=0 // pred_region
    _
  $region9: #{controller_forward_prepared.1} parent=0 // pred_fallthru
    _
  // Predicated region
  $region10: #{controller_forward_prepared.1} parent=0 // pred_check
    _
  $region11: #{controller_forward_prepared.1} parent=0 // pred_check_branch
    %13 = sbr.rel (0) target = $region13
  $region12: #{controller_forward_prepared.1} parent=0 // pred_region
    _
  $region13: #{controller_forward_prepared.1} parent=0 // pred_fallthru
    _
  %v14 = vld [vmem:[%s0] sm:$0xff]
  %v15 = vld [vmem:[%s0 + $0x8] sm:$0xff]
  %v16 = vld [vmem:[%s1] sm:$0xff]
  %v17 = vld [vmem:[%s1 + $0x8] sm:$0xff]
  %v18 = vld [vmem:[%s1 + $0x10] sm:$0xff]
  %v19 = vld [vmem:[%s1 + $0x18] sm:$0xff]
  %v20 = vld [vmem:[%s1 + $0x20] sm:$0xff]
  %v21 = vld [vmem:[%s1 + $0x28] sm:$0xff]
  %v22 = vld [vmem:[%s1 + $0x30] sm:$0xff]
  %v23 = vld [vmem:[%s1 + $0x38] sm:$0xff]
  %v24 = vld [vmem:[%s1 + $0x40] sm:$0xff]
  %v25 = vld [vmem:[%s1 + $0x48] sm:$0xff]
  %v26 = vld [vmem:[%s1 + $0x50] sm:$0xff]
  %v27 = vld [vmem:[%s1 + $0x58] sm:$0xff]
  %v28 = vld [vmem:[%s1 + $0x60] sm:$0xff]
  %v29 = vld [vmem:[%s1 + $0x68] sm:$0xff]
  %v30 = vld [vmem:[%s1 + $0x70] sm:$0xff]
  %v31 = vld [vmem:[%s1 + $0x78] sm:$0xff]
  %v32 = vld [vmem:[%s1 + $0x80] sm:$0xff]
  %v33 = vld [vmem:[%s1 + $0x88] sm:$0xff]
  %v34 = vld [vmem:[%s1 + $0x90] sm:$0xff]
  %v35 = vld [vmem:[%s1 + $0x98] sm:$0xff]
  %v36 = vld [vmem:[%s1 + $0xa0] sm:$0xff]
  %v37 = vld [vmem:[%s1 + $0xa8] sm:$0xff]
  %v38 = vld [vmem:[%s1 + $0xb0] sm:$0xff]
  %v39 = vld [vmem:[%s1 + $0xb8] sm:$0xff]
  %v40 = vld [vmem:[%s1 + $0xc0] sm:$0xff]
  %v41 = vld [vmem:[%s1 + $0xc8] sm:$0xff]
  %v42 = vld [vmem:[%s1 + $0xd0] sm:$0xff]
  %v43 = vld [vmem:[%s1 + $0xd8] sm:$0xff]
  %v44 = vld [vmem:[%s1 + $0xe0] sm:$0xff]
  %v45 = vld [vmem:[%s1 + $0xe8] sm:$0xff]
  %v46 = vld [vmem:[%s1 + $0xf0] sm:$0xff]
  %v47 = vld [vmem:[%s1 + $0xf8] sm:$0xff]
  %v48 = vld [vmem:[%s2] sm:$0x1]
  %v50 = vlaneseq
  %v51 = vshrl.u32 %v50, 7
  %v52 = vsub.s32 0, %v51
  %v53 = vrot.slane %v48, %v52
  %55 = vmatprep.subr.mxu0 0.0
  %56 = vmatpush1.msra.mxu0 %v16
  %57 = vmatprep.subr.mxu0 0.0
  %58 = vmatpush1.msra.mxu0 %v17
  %59 = vmatprep.subr.mxu0 0.0
  %60 = vmatpush1.msra.mxu0 %v18
  %61 = vmatprep.subr.mxu0 0.0
  %62 = vmatpush1.msra.mxu0 %v19
  %63 = vmatprep.subr.mxu0 0.0
  %64 = vmatpush1.msra.mxu0 %v20
  %65 = vmatprep.subr.mxu0 0.0
  %66 = vmatpush1.msra.mxu0 %v21
  %67 = vmatprep.subr.mxu0 0.0
  %68 = vmatpush1.msra.mxu0 %v22
  %69 = vmatprep.subr.mxu0 0.0
  %70 = vmatpush1.msra.mxu0 %v23
  %71 = vmatprep.subr.mxu0 0.0
  %72 = vmatpush1.msra.mxu0 %v24
  %73 = vmatprep.subr.mxu0 0.0
  %74 = vmatpush1.msra.mxu0 %v25
  %75 = vmatprep.subr.mxu0 0.0
  %76 = vmatpush1.msra.mxu0 %v26
  %77 = vmatprep.subr.mxu0 0.0
  %78 = vmatpush1.msra.mxu0 %v27
  %79 = vmatprep.subr.mxu0 0.0
  %80 = vmatpush1.msra.mxu0 %v28
  %81 = vmatprep.subr.mxu0 0.0
  %82 = vmatpush1.msra.mxu0 %v29
  %83 = vmatprep.subr.mxu0 0.0
  %84 = vmatpush1.msra.mxu0 %v30
  %85 = vmatprep.subr.mxu0 0.0
  %86 = vmatpush1.msra.mxu0 %v31
  %87 = vmatprep.subr.mxu0 0.0
  %88 = vmatpush1.msra.mxu0 %v32
  %89 = vmatprep.subr.mxu0 0.0
  %90 = vmatpush1.msra.mxu0 %v33
  %91 = vmatprep.subr.mxu0 0.0
  %92 = vmatpush1.msra.mxu0 %v34
  %93 = vmatprep.subr.mxu0 0.0
  %94 = vmatpush1.msra.mxu0 %v35
  %95 = vmatprep.subr.mxu0 0.0
  %96 = vmatpush1.msra.mxu0 %v36
  %97 = vmatprep.subr.mxu0 0.0
  %98 = vmatpush1.msra.mxu0 %v37
  %99 = vmatprep.subr.mxu0 0.0
  %100 = vmatpush1.msra.mxu0 %v38
  %101 = vmatprep.subr.mxu0 0.0
  %102 = vmatpush1.msra.mxu0 %v39
  %103 = vmatprep.subr.mxu0 0.0
  %104 = vmatpush1.msra.mxu0 %v40
  %105 = vmatprep.subr.mxu0 0.0
  %106 = vmatpush1.msra.mxu0 %v41
  %107 = vmatprep.subr.mxu0 0.0
  %108 = vmatpush1.msra.mxu0 %v42
  %109 = vmatprep.subr.mxu0 0.0
  %110 = vmatpush1.msra.mxu0 %v43
  %111 = vmatprep.subr.mxu0 0.0
  %112 = vmatpush1.msra.mxu0 %v44
  %113 = vmatprep.subr.mxu0 0.0
  %114 = vmatpush1.msra.mxu0 %v45
  %115 = vmatprep.subr.mxu0 0.0
  %116 = vmatpush1.msra.mxu0 %v46
  %117 = vmatprep.subr.mxu0 0.0
  %118 = vmatpush1.msra.mxu0 %v47
  %119 = vmatprep.mubr.f32.mxu0 %v15
  %120 = vmatmul.mubr.f32.gmra.mrb[0].mxu0 %v14
  %v121 = vpop.f32.mrb[0].mxu0
  %v122 = vadd.f32 %v53, %v121
  %v123 = vpop.f32.mrb[0].mxu0
  %124 = vdwg.mxu0
  %v125 = vtanh.pop %v122
  %vm126 = vcmask 64512
  %127 = vst.msk [vmem:[%s3] sm:$0xff] %vm126, %v125
  // Predicated region
  $region14: #{controller_forward_prepared.1} parent=0 // pred_check
    _
  $region15: #{controller_forward_prepared.1} parent=0 // pred_check_branch
    %129 = sbr.rel (0) target = $region17
  $region16: #{controller_forward_prepared.1} parent=0 // pred_region
    _
  $region17: #{controller_forward_prepared.1} parent=0 // pred_fallthru
    _
  // Predicated region
  $region18: #{controller_forward_prepared.1} parent=0 // pred_check
    _
  $region19: #{controller_forward_prepared.1} parent=0 // pred_check_branch
    %131 = sbr.rel (0) target = $region21
  $region20: #{controller_forward_prepared.1} parent=0 // pred_region
    _
  $region21: #{controller_forward_prepared.1} parent=0 // pred_fallthru
    _

</llo_original>
